<compile_context>
chip_gen: v5e
topology: v5e:2x2
jax: 0.10.0
libtpu: 0.0.40
codegen_flags: <defaults>
</compile_context>

<pallas_src>
import jax
import jax.numpy as jnp
from jax.experimental import pallas as pl
from jax.experimental.pallas import tpu as pltpu


def stacked_linear_kernel(x_ref, w1_ref, b1_ref, w2_ref, b2_ref, o_ref):
    # One batch tile per grid step: two matmuls + bias + tanh, all in VMEM.
    h = jnp.tanh(
        jnp.dot(x_ref[...], w1_ref[...], preferred_element_type=jnp.float32)
        + b1_ref[...]
    )
    y = jnp.tanh(
        jnp.dot(h, w2_ref[...], preferred_element_type=jnp.float32) + b2_ref[...]
    )
    o_ref[...] = y.astype(o_ref.dtype)


def _round_up(n, m):
    return ((n + m - 1) // m) * m


def _padded_bytes(rows, cols, itemsize):
    # Real VMEM footprint of a tile: lane dim padded to 128, sublanes to 8.
    return _round_up(rows, 8) * _round_up(cols, 128) * itemsize


def _vmem_capacity_bytes():
    try:
        cap = getattr(pltpu.get_tpu_info(), "vmem_capacity_bytes", None)
        if cap:
            return int(cap)
    except Exception:
        pass
    return 64 << 20  # conservative fallback (v7x-sized VMEM)


def _fold_factor(h):
    """How many batch rows to fold into the lane axis for 128-lane-dense tiles."""
    if h >= 128 or 128 % h != 0:
        return 1
    return 128 // h


def stacked_linear(x, w1, b1, w2, b2, *, block_b=65536):
    """x: (B, L); w1: (L, H); b1: (1, H); w2: (H, H); b2: (1, H) with H = L//2."""
    B, L = x.shape
    H = w1.shape[1]
    dtype = x.dtype
    itemsize = jnp.dtype(dtype).itemsize

    # ---- lane-dense folded layout -------------------------------------------
    fold = _fold_factor(H)
    Lf, Hf = L * fold, H * fold
    align = 8 * fold  # batch tile granularity that keeps (8,128)-legal blocks

    # Block-diagonal weights / tiled biases: x_folded @ kron(I, W) + tile(b)
    # computes exactly the same per-row Linear as the un-folded formulation.
    w1f = jnp.kron(jnp.eye(fold, dtype=w1.dtype), w1)       # (Lf, Hf)
    w2f = jnp.kron(jnp.eye(fold, dtype=w2.dtype), w2)       # (Hf, Hf)
    b1f = jnp.tile(jnp.reshape(b1, (1, H)), (1, fold))      # (1, Hf)
    b2f = jnp.tile(jnp.reshape(b2, (1, H)), (1, fold))      # (1, Hf)

    # ---- tile-size selection from a padded-aware per-generation VMEM budget --
    vmem_cap = _vmem_capacity_bytes()
    budget = int(0.70 * vmem_cap)          # ~44 MiB on v7x, ~90 MiB on v5e/v6e
    weight_bytes = 2 * (                   # conservatively count double buffers
        _padded_bytes(Lf, Hf, itemsize)
        + _padded_bytes(Hf, Hf, itemsize)
        + 2 * _padded_bytes(1, Hf, itemsize)
    )
    # Per folded row: double-buffered x tile + double-buffered out tile.
    per_folded_row = 2 * itemsize * (_round_up(Lf, 128) + _round_up(Hf, 128))
    slack = 2 << 20
    tbf_vmem = max(8, (budget - weight_bytes - slack) // per_folded_row)
    tb_vmem = tbf_vmem * fold

    TB = min(int(block_b), int(tb_vmem), _round_up(B, align))
    if B > 2 * align:
        # Keep >= 2 grid steps so the "parallel" axis can shard across both
        # TensorCores on v7x (harmless on single-TC v5e/v6e).
        TB = min(TB, _round_up(-(-B // 2), align))
    TB = max(align, (TB // align) * align)

    Bp = _round_up(B, TB)
    if Bp != B:
        x = jnp.pad(x, ((0, Bp - B), (0, 0)))
    x_f = x.reshape(Bp // fold, Lf)        # free row-major metadata reshape
    TBf = TB // fold
    grid = (Bp // TB,)

    working_set = weight_bytes + TBf * per_folded_row
    vmem_limit = int(min(max(working_set + (4 << 20), 16 << 20),
                         int(0.9 * vmem_cap)))

    out_f = pl.pallas_call(
        stacked_linear_kernel,
        out_shape=jax.ShapeDtypeStruct((Bp // fold, Hf), dtype),
        grid_spec=pltpu.PrefetchScalarGridSpec(
            num_scalar_prefetch=0,
            grid=grid,
            in_specs=[
                pl.BlockSpec((TBf, Lf), lambda i: (i, 0)),   # x: streamed tiles
                pl.BlockSpec((Lf, Hf), lambda i: (0, 0)),    # w1: VMEM-resident
                pl.BlockSpec((1, Hf), lambda i: (0, 0)),     # b1: VMEM-resident
                pl.BlockSpec((Hf, Hf), lambda i: (0, 0)),    # w2: VMEM-resident
                pl.BlockSpec((1, Hf), lambda i: (0, 0)),     # b2: VMEM-resident
            ],
            out_specs=pl.BlockSpec((TBf, Hf), lambda i: (i, 0)),
        ),
        compiler_params=pltpu.CompilerParams(
            dimension_semantics=("parallel",),
            vmem_limit_bytes=vmem_limit,
        ),
    )(x_f, w1f, b1f, w2f, b2f)

    out = out_f.reshape(Bp, H)             # free row-major metadata reshape
    return out[:B] if Bp != B else out


def init_params(key, latent_shape, dtype=jnp.float32):
    """Deterministic init mirroring PyTorch nn.Linear default U(-1/sqrt(fan_in), +)."""
    half = latent_shape // 2
    k1, k2, k3, k4 = jax.random.split(key, 4)
    bound1 = 1.0 / jnp.sqrt(latent_shape)
    bound2 = 1.0 / jnp.sqrt(half)
    # stored as (in_features, out_features), i.e. transposed PyTorch layout
    w1 = jax.random.uniform(k1, (latent_shape, half), dtype, -bound1, bound1)
    b1 = jax.random.uniform(k2, (1, half), dtype, -bound1, bound1)
    w2 = jax.random.uniform(k3, (half, half), dtype, -bound2, bound2)
    b2 = jax.random.uniform(k4, (1, half), dtype, -bound2, bound2)
    return w1, b1, w2, b2


if __name__ == "__main__":
    latent_shape = 32
    key = jax.random.PRNGKey(0)
    kx, kp, kx2 = jax.random.split(key, 3)
    w1, b1, w2, b2 = init_params(kp, latent_shape)

    def ref_fn(x):
        return jnp.tanh(jnp.tanh(x @ w1 + b1) @ w2 + b2)

    # 1) Small batch (single grid step, padded up to one aligned tile).
    batch = 8
    x = jax.random.normal(kx, (batch, latent_shape), jnp.float32)
    out = jax.block_until_ready(stacked_linear(x, w1, b1, w2, b2))
    assert out.shape == (batch, latent_shape // 2)
    assert jnp.allclose(out, ref_fn(x), atol=1e-5, rtol=1e-5)

    # 2) Larger, non-tile-multiple batch to exercise the batch grid + padding.
    batch2 = 300
    x2 = jax.random.normal(kx2, (batch2, latent_shape), jnp.float32)
    out2 = jax.block_until_ready(stacked_linear(x2, w1, b1, w2, b2, block_b=128))
    assert out2.shape == (batch2, latent_shape // 2)
    assert jnp.allclose(out2, ref_fn(x2), atol=1e-5, rtol=1e-5)

    print("KERNEL_OK")
</pallas_src>

<mosaic_0001>
module attributes {stable_mosaic.version = 11 : i64} {
  func.func @stacked_linear_kernel(%arg0: i32, %arg1: memref<8x256xf32, #tpu.memory_space<vmem>>, %arg2: memref<256x128xf32, #tpu.memory_space<vmem>>, %arg3: memref<1x128xf32, #tpu.memory_space<vmem>>, %arg4: memref<128x128xf32, #tpu.memory_space<vmem>>, %arg5: memref<1x128xf32, #tpu.memory_space<vmem>>, %arg6: memref<8x128xf32, #tpu.memory_space<vmem>>) attributes {dimension_semantics = [#tpu.dimension_semantics<parallel>], iteration_bounds = array<i64: 1>, scalar_prefetch = 0 : i64, scratch_operands = 0 : i64, tpu.core_type = #tpu.core_type<tc>, window_params = [{transform_indices = @transform_0, window_bounds = array<i64: 8, 256>}, {pipeline_mode = #tpu.pipeline_mode<synchronous>, transform_indices = @transform_1, window_bounds = array<i64: 256, 128>}, {pipeline_mode = #tpu.pipeline_mode<synchronous>, transform_indices = @transform_2, window_bounds = array<i64: 1, 128>}, {pipeline_mode = #tpu.pipeline_mode<synchronous>, transform_indices = @transform_3, window_bounds = array<i64: 128, 128>}, {pipeline_mode = #tpu.pipeline_mode<synchronous>, transform_indices = @transform_4, window_bounds = array<i64: 1, 128>}, {transform_indices = @transform_5, window_bounds = array<i64: 8, 128>}]} {
    %c0 = arith.constant 0 : index
    %c0_0 = arith.constant 0 : index
    %0 = vector.load %arg1[%c0, %c0_0] : memref<8x256xf32, #tpu.memory_space<vmem>>, vector<8x256xf32>
    %c0_1 = arith.constant 0 : index
    %c0_2 = arith.constant 0 : index
    %1 = vector.load %arg2[%c0_1, %c0_2] : memref<256x128xf32, #tpu.memory_space<vmem>>, vector<256x128xf32>
    %cst = arith.constant dense<0.000000e+00> : vector<8x128xf32>
    %2 = tpu.matmul %0, %1, %cst {dimension_numbers = #tpu.dot_dimension_numbers<[1], [0], [0], [1], [0, 0, 1, 1], [], []>} : vector<8x256xf32>, vector<256x128xf32>, vector<8x128xf32> -> vector<8x128xf32>
    %c0_3 = arith.constant 0 : index
    %c0_4 = arith.constant 0 : index
    %3 = vector.load %arg3[%c0_3, %c0_4] : memref<1x128xf32, #tpu.memory_space<vmem>>, vector<1x128xf32>
    %4 = vector.broadcast %3 : vector<1x128xf32> to vector<8x128xf32>
    %5 = arith.addf %2, %4 : vector<8x128xf32>
    %6 = math.tanh %5 : vector<8x128xf32>
    %c0_5 = arith.constant 0 : index
    %c0_6 = arith.constant 0 : index
    %7 = vector.load %arg4[%c0_5, %c0_6] : memref<128x128xf32, #tpu.memory_space<vmem>>, vector<128x128xf32>
    %cst_7 = arith.constant dense<0.000000e+00> : vector<8x128xf32>
    %8 = tpu.matmul %6, %7, %cst_7 {dimension_numbers = #tpu.dot_dimension_numbers<[1], [0], [0], [1], [0, 0, 1, 1], [], []>} : vector<8x128xf32>, vector<128x128xf32>, vector<8x128xf32> -> vector<8x128xf32>
    %c0_8 = arith.constant 0 : index
    %c0_9 = arith.constant 0 : index
    %9 = vector.load %arg5[%c0_8, %c0_9] : memref<1x128xf32, #tpu.memory_space<vmem>>, vector<1x128xf32>
    %10 = vector.broadcast %9 : vector<1x128xf32> to vector<8x128xf32>
    %11 = arith.addf %8, %10 : vector<8x128xf32>
    %12 = math.tanh %11 : vector<8x128xf32>
    %c0_10 = arith.constant 0 : index
    %c0_11 = arith.constant 0 : index
    %13 = vector.load %arg6[%c0_10, %c0_11] : memref<8x128xf32, #tpu.memory_space<vmem>>, vector<8x128xf32>
    tpu.vector_store %arg6[%c0_10, %c0_11], %12 {strides = array<i32>} : memref<8x128xf32, #tpu.memory_space<vmem>>, vector<8x128xf32>,
    return
  }
  func.func @transform_0(%arg0: i32) -> (i32, i32) {
    %c0_i32 = arith.constant 0 : i32
    %c0_i32_0 = arith.constant 0 : i32
    return %arg0, %c0_i32 : i32, i32
  }
  func.func @transform_1(%arg0: i32) -> (i32, i32) {
    %c0_i32 = arith.constant 0 : i32
    %c0_i32_0 = arith.constant 0 : i32
    %c0_i32_1 = arith.constant 0 : i32
    return %c0_i32, %c0_i32_0 : i32, i32
  }
  func.func @transform_2(%arg0: i32) -> (i32, i32) {
    %c0_i32 = arith.constant 0 : i32
    %c0_i32_0 = arith.constant 0 : i32
    %c0_i32_1 = arith.constant 0 : i32
    return %c0_i32, %c0_i32_0 : i32, i32
  }
  func.func @transform_3(%arg0: i32) -> (i32, i32) {
    %c0_i32 = arith.constant 0 : i32
    %c0_i32_0 = arith.constant 0 : i32
    %c0_i32_1 = arith.constant 0 : i32
    return %c0_i32, %c0_i32_0 : i32, i32
  }
  func.func @transform_4(%arg0: i32) -> (i32, i32) {
    %c0_i32 = arith.constant 0 : i32
    %c0_i32_0 = arith.constant 0 : i32
    %c0_i32_1 = arith.constant 0 : i32
    return %c0_i32, %c0_i32_0 : i32, i32
  }
  func.func @transform_5(%arg0: i32) -> (i32, i32) {
    %c0_i32 = arith.constant 0 : i32
    %c0_i32_0 = arith.constant 0 : i32
    return %arg0, %c0_i32 : i32, i32
  }
}

</mosaic_0001>

<llo_original>
// kernel: tpu_custom_call.1
$region0: #{tpu_custom_call.1}
  #allocation0 [shape = 'u32[]', space=smem, size = 0x4, offset = 0x4, fixed_abs, tag = 'smem constant byte address 0x4 - core index']
  #allocation1 [shape = 'u32[72,128]{1,0:T(1,128)}', space=vmem, size = 0x9000, scoped, tag = 'internal scratch']
  %s0 = inlined_call_operand.hbm [shape: f32[8,256], index: 0, kind: input, shape index: {}]
  %s1 = inlined_call_operand.hbm [shape: f32[256,128], index: 1, kind: input, shape index: {}]
  %s2 = inlined_call_operand.vmem [shape: f32[1,128], index: 2, kind: input, shape index: {}]
  %s3 = inlined_call_operand.hbm [shape: f32[128,128], index: 3, kind: input, shape index: {}]
  %s4 = inlined_call_operand.vmem [shape: f32[1,128], index: 4, kind: input, shape index: {}]
  %s5 = inlined_call_operand.hbm [shape: f32[8,128], index: 5, kind: output, shape index: {}]
  %s6 = sld [smem:[#allocation0]]
  $region42: #{tpu_custom_call.1} parent=0
    _
  %s8 = ssub.s32 1, %s6
  %s9 = scalar_select 0, %s8, %s6
  $region1: #{tpu_custom_call.1} parent=0
    #allocation2 [shape = 'u8[8192]{0}', space=vmem, size = 0x2000, scoped, tag = 'input window, operand 0, single buffered']
    #allocation3 [shape = 's32[1]{0}', space=sflag, size = 0x4, scoped, tag = 'scoped memory for tpu_custom_call.1']
    #allocation4 [shape = 's32[1]{0}', space=sflag, size = 0x4, scoped, tag = 'scoped memory for tpu_custom_call.1']
    #allocation5 [shape = 'u8[131072]{0}', space=vmem, size = 0x20000, scoped, tag = 'input window, operand 1, single buffered']
    #allocation6 [shape = 's32[1]{0}', space=sflag, size = 0x4, scoped, tag = 'scoped memory for tpu_custom_call.1']
    #allocation7 [shape = 'u8[65536]{0}', space=vmem, size = 0x10000, scoped, tag = 'input window, operand 3, single buffered']
    #allocation8 [shape = 'u8[4096]{0}', space=vmem, size = 0x1000, scoped, tag = 'output window, operand 0, single buffered']
    %10 = vsyncpa [#allocation3], 0
    %11 = vsyncpa [#allocation6], 0
    %12 = vsyncpa [#allocation4], 0
    // Predicated region
    $region2: #{tpu_custom_call.1} parent=1 // pred_check
      _
    $region3: #{tpu_custom_call.1} parent=1 // pred_check_branch
      %14 = sbr.rel (0) target = $region5
    $region4: #{tpu_custom_call.1} parent=1 // pred_region
      %16 = vsyncadd [#allocation3], 0
      %s18 = sshll.u32 %s0, 4
      %s19 = int_to_ptr.hbm [resolvable:$true] %s18
      %s20 = sshll.u32 [#allocation2], 4
      %s21 = int_to_ptr.vmem [resolvable:$true] %s20
      %23 = dma.hbm_to_vmem [thread:$0]  %s19, 256, %s21, [#allocation3]
    $region5: #{tpu_custom_call.1} parent=1 // pred_fallthru
      _
    // Predicated region
    $region6: #{tpu_custom_call.1} parent=1 // pred_check
      _
    $region7: #{tpu_custom_call.1} parent=1 // pred_check_branch
      %25 = sbr.rel (0) target = $region9
    $region8: #{tpu_custom_call.1} parent=1 // pred_region
      %27 = vsyncadd [#allocation6], 0
      %s28 = sshll.u32 %s1, 4
      %s29 = int_to_ptr.hbm [resolvable:$true] %s28
      %s30 = sshll.u32 [#allocation5], 4
      %s31 = int_to_ptr.vmem [resolvable:$true] %s30
      %36 = dma.hbm_to_vmem [thread:$0]  %s29, 4096, %s31, [#allocation6], 128, 128, 8
    $region9: #{tpu_custom_call.1} parent=1 // pred_fallthru
      _
    // Predicated region
    $region10: #{tpu_custom_call.1} parent=1 // pred_check
      _
    $region11: #{tpu_custom_call.1} parent=1 // pred_check_branch
      %38 = sbr.rel (0) target = $region13
    $region12: #{tpu_custom_call.1} parent=1 // pred_region
      _
    $region13: #{tpu_custom_call.1} parent=1 // pred_fallthru
      _
    // Predicated region
    $region14: #{tpu_custom_call.1} parent=1 // pred_check
      _
    $region15: #{tpu_custom_call.1} parent=1 // pred_check_branch
      %40 = sbr.rel (0) target = $region17
    $region16: #{tpu_custom_call.1} parent=1 // pred_region
      %42 = vsyncadd [#allocation6], 0
      %s43 = sshll.u32 %s3, 4
      %s44 = int_to_ptr.hbm [resolvable:$true] %s43
      %s45 = sshll.u32 [#allocation7], 4
      %s46 = int_to_ptr.vmem [resolvable:$true] %s45
      %51 = dma.hbm_to_vmem [thread:$0]  %s44, 2048, %s46, [#allocation6], 128, 128, 8
    $region17: #{tpu_custom_call.1} parent=1 // pred_fallthru
      _
    // Predicated region
    $region18: #{tpu_custom_call.1} parent=1 // pred_check
      _
    $region19: #{tpu_custom_call.1} parent=1 // pred_check_branch
      %53 = sbr.rel (0) target = $region21
    $region20: #{tpu_custom_call.1} parent=1 // pred_region
      _
    $region21: #{tpu_custom_call.1} parent=1 // pred_fallthru
      _
    // Predicated region
    $region22: #{tpu_custom_call.1} parent=1 // pred_check
      _
    $region23: #{tpu_custom_call.1} parent=1 // pred_check_branch
      %55 = sbr.rel (0) target = $region25
    $region24: #{tpu_custom_call.1} parent=1 // pred_region
      %57 = dma.done [#allocation3], 256
    $region25: #{tpu_custom_call.1} parent=1 // pred_fallthru
      _
    // Predicated region
    $region26: #{tpu_custom_call.1} parent=1 // pred_check
      _
    $region27: #{tpu_custom_call.1} parent=1 // pred_check_branch
      %59 = sbr.rel (0) target = $region29
    $region28: #{tpu_custom_call.1} parent=1 // pred_region
      %61 = dma.done [#allocation6], 4096
    $region29: #{tpu_custom_call.1} parent=1 // pred_fallthru
      _
    // Predicated region
    $region30: #{tpu_custom_call.1} parent=1 // pred_check
      _
    $region31: #{tpu_custom_call.1} parent=1 // pred_check_branch
      %63 = sbr.rel (0) target = $region33
    $region32: #{tpu_custom_call.1} parent=1 // pred_region
      %65 = dma.done [#allocation6], 2048
    $region33: #{tpu_custom_call.1} parent=1 // pred_fallthru
      _
    %v66 = vld [vmem:[#allocation2] sm:$0xff]
    %v67 = vld [vmem:[#allocation2 + $0x8] sm:$0xff]
    %v68 = vld [vmem:[#allocation5] sm:$0xff]
    %v69 = vld [vmem:[#allocation5 + $0x8] sm:$0xff]
    %v70 = vld [vmem:[#allocation5 + $0x10] sm:$0xff]
    %v71 = vld [vmem:[#allocation5 + $0x18] sm:$0xff]
    %v72 = vld [vmem:[#allocation5 + $0x20] sm:$0xff]
    %v73 = vld [vmem:[#allocation5 + $0x28] sm:$0xff]
    %v74 = vld [vmem:[#allocation5 + $0x30] sm:$0xff]
    %v75 = vld [vmem:[#allocation5 + $0x38] sm:$0xff]
    %v76 = vld [vmem:[#allocation5 + $0x40] sm:$0xff]
    %v77 = vld [vmem:[#allocation5 + $0x48] sm:$0xff]
    %v78 = vld [vmem:[#allocation5 + $0x50] sm:$0xff]
    %v79 = vld [vmem:[#allocation5 + $0x58] sm:$0xff]
    %v80 = vld [vmem:[#allocation5 + $0x60] sm:$0xff]
    %v81 = vld [vmem:[#allocation5 + $0x68] sm:$0xff]
    %v82 = vld [vmem:[#allocation5 + $0x70] sm:$0xff]
    %v83 = vld [vmem:[#allocation5 + $0x78] sm:$0xff]
    %v84 = vld [vmem:[#allocation5 + $0x80] sm:$0xff]
    %v85 = vld [vmem:[#allocation5 + $0x88] sm:$0xff]
    %v86 = vld [vmem:[#allocation5 + $0x90] sm:$0xff]
    %v87 = vld [vmem:[#allocation5 + $0x98] sm:$0xff]
    %v88 = vld [vmem:[#allocation5 + $0xa0] sm:$0xff]
    %v89 = vld [vmem:[#allocation5 + $0xa8] sm:$0xff]
    %v90 = vld [vmem:[#allocation5 + $0xb0] sm:$0xff]
    %v91 = vld [vmem:[#allocation5 + $0xb8] sm:$0xff]
    %v92 = vld [vmem:[#allocation5 + $0xc0] sm:$0xff]
    %v93 = vld [vmem:[#allocation5 + $0xc8] sm:$0xff]
    %v94 = vld [vmem:[#allocation5 + $0xd0] sm:$0xff]
    %v95 = vld [vmem:[#allocation5 + $0xd8] sm:$0xff]
    %v96 = vld [vmem:[#allocation5 + $0xe0] sm:$0xff]
    %v97 = vld [vmem:[#allocation5 + $0xe8] sm:$0xff]
    %v98 = vld [vmem:[#allocation5 + $0xf0] sm:$0xff]
    %v99 = vld [vmem:[#allocation5 + $0xf8] sm:$0xff]
    %v100 = vld [vmem:[%s2] sm:$0x1]
    %v102 = vperm.slane %v100, 0
    %104 = vmatpush.msra.mxu0 %v83
    %105 = vmatpush.msra.mxu0 %v82
    %106 = vmatpush.msra.mxu0 %v81
    %107 = vmatpush.msra.mxu0 %v80
    %108 = vmatpush.msra.mxu0 %v79
    %109 = vmatpush.msra.mxu0 %v78
    %110 = vmatpush.msra.mxu0 %v77
    %111 = vmatpush.msra.mxu0 %v76
    %112 = vmatpush.msra.mxu0 %v75
    %113 = vmatpush.msra.mxu0 %v74
    %114 = vmatpush.msra.mxu0 %v73
    %115 = vmatpush.msra.mxu0 %v72
    %116 = vmatpush.msra.mxu0 %v71
    %117 = vmatpush.msra.mxu0 %v70
    %118 = vmatpush.msra.mxu0 %v69
    %119 = vmatpush.msra.mxu0 %v68
    %120 = vmatmul.f32.gmra.mxu0 %v66
    %v121 = vpop.f32.mrf.mxu0
    %v122 = vadd.f32 %v102, %v121
    %123 = vdwg.mxu0
    %124 = vmatpush.msra.mxu0 %v99
    %125 = vmatpush.msra.mxu0 %v98
    %126 = vmatpush.msra.mxu0 %v97
    %127 = vmatpush.msra.mxu0 %v96
    %128 = vmatpush.msra.mxu0 %v95
    %129 = vmatpush.msra.mxu0 %v94
    %130 = vmatpush.msra.mxu0 %v93
    %131 = vmatpush.msra.mxu0 %v92
    %132 = vmatpush.msra.mxu0 %v91
    %133 = vmatpush.msra.mxu0 %v90
    %134 = vmatpush.msra.mxu0 %v89
    %135 = vmatpush.msra.mxu0 %v88
    %136 = vmatpush.msra.mxu0 %v87
    %137 = vmatpush.msra.mxu0 %v86
    %138 = vmatpush.msra.mxu0 %v85
    %139 = vmatpush.msra.mxu0 %v84
    %140 = vmatmul.f32.gmra.mxu0 %v67
    %v141 = vpop.f32.mrf.mxu0
    %v142 = vadd.f32 %v122, %v141
    %143 = vdwg.mxu0
    %v144 = vtanh.pop %v142
    %v145 = vld [vmem:[#allocation7] sm:$0xff]
    %v146 = vld [vmem:[#allocation7 + $0x8] sm:$0xff]
    %v147 = vld [vmem:[#allocation7 + $0x10] sm:$0xff]
    %v148 = vld [vmem:[#allocation7 + $0x18] sm:$0xff]
    %v149 = vld [vmem:[#allocation7 + $0x20] sm:$0xff]
    %v150 = vld [vmem:[#allocation7 + $0x28] sm:$0xff]
    %v151 = vld [vmem:[#allocation7 + $0x30] sm:$0xff]
    %v152 = vld [vmem:[#allocation7 + $0x38] sm:$0xff]
    %v153 = vld [vmem:[#allocation7 + $0x40] sm:$0xff]
    %v154 = vld [vmem:[#allocation7 + $0x48] sm:$0xff]
    %v155 = vld [vmem:[#allocation7 + $0x50] sm:$0xff]
    %v156 = vld [vmem:[#allocation7 + $0x58] sm:$0xff]
    %v157 = vld [vmem:[#allocation7 + $0x60] sm:$0xff]
    %v158 = vld [vmem:[#allocation7 + $0x68] sm:$0xff]
    %v159 = vld [vmem:[#allocation7 + $0x70] sm:$0xff]
    %v160 = vld [vmem:[#allocation7 + $0x78] sm:$0xff]
    %v161 = vld [vmem:[%s4] sm:$0x1]
    %v163 = vperm.slane %v161, 0
    %165 = vmatpush.msra.mxu0 %v160
    %166 = vmatpush.msra.mxu0 %v159
    %167 = vmatpush.msra.mxu0 %v158
    %168 = vmatpush.msra.mxu0 %v157
    %169 = vmatpush.msra.mxu0 %v156
    %170 = vmatpush.msra.mxu0 %v155
    %171 = vmatpush.msra.mxu0 %v154
    %172 = vmatpush.msra.mxu0 %v153
    %173 = vmatpush.msra.mxu0 %v152
    %174 = vmatpush.msra.mxu0 %v151
    %175 = vmatpush.msra.mxu0 %v150
    %176 = vmatpush.msra.mxu0 %v149
    %177 = vmatpush.msra.mxu0 %v148
    %178 = vmatpush.msra.mxu0 %v147
    %179 = vmatpush.msra.mxu0 %v146
    %180 = vmatpush.msra.mxu0 %v145
    %181 = vmatmul.f32.gmra.mxu0 %v144
    %v182 = vpop.f32.mrf.mxu0
    %v183 = vadd.f32 %v163, %v182
    %184 = vdwg.mxu0
    %v185 = vtanh.pop %v183
    %186 = vst [vmem:[#allocation8] sm:$0xff] %v185
    // Predicated region
    $region34: #{tpu_custom_call.1} parent=1 // pred_check
      _
    $region35: #{tpu_custom_call.1} parent=1 // pred_check_branch
      %188 = sbr.rel (0) target = $region37
    $region36: #{tpu_custom_call.1} parent=1 // pred_region
      %190 = vsyncadd [#allocation4], 0
      %s192 = sshll.u32 [#allocation8], 4
      %s193 = int_to_ptr.vmem [resolvable:$true] %s192
      %s194 = sshll.u32 %s5, 4
      %s195 = int_to_ptr.hbm [resolvable:$true] %s194
      %197 = dma.vmem_to_hbm [thread:$0]  %s193, 128, %s195, [#allocation4]
    $region37: #{tpu_custom_call.1} parent=1 // pred_fallthru
      _
    // Predicated region
    $region38: #{tpu_custom_call.1} parent=1 // pred_check
      _
    $region39: #{tpu_custom_call.1} parent=1 // pred_check_branch
      %199 = sbr.rel (0) target = $region41
    $region40: #{tpu_custom_call.1} parent=1 // pred_region
      %201 = dma.done [#allocation4], 128
    $region41: #{tpu_custom_call.1} parent=1 // pred_fallthru
      _
    %202 = vsyncpa [#allocation3], 1
    %203 = vsyncpa [#allocation6], 1
    %204 = vsyncpa [#allocation4], 1

</llo_original>
